<compile_context>
chip_gen: v5e
topology: v5e:2x2
jax: 0.10.0
libtpu: 0.0.40
codegen_flags: <defaults>
</compile_context>

<pallas_src>
import jax
import jax.numpy as jnp
from jax.experimental import pallas as pl
from jax.experimental.pallas import tpu as pltpu


def _round_up(n, m):
    return ((n + m - 1) // m) * m


def _batch_tiling(batch, max_tile):
    """Return (TB, padded_B): TB multiple of 16 (bf16 sublanes), padded_B % TB == 0."""
    b_pad = _round_up(batch, 16)
    tb = min(b_pad, _round_up(max_tile, 16))
    b_pad = _round_up(b_pad, tb)
    return tb, b_pad


def _vmem_budget_bytes(tb, n_states, hidden, n_actions):
    """Rough per-call VMEM need (double-buffered I/O + resident params + f32 temps)."""
    x_tile = tb * n_states * 2                              # bf16
    out_tile = tb * (n_actions + 1) * 4                     # f32
    weights = (n_states * hidden + 2 * hidden * hidden
               + 2 * hidden * (n_actions + 1)) * 2          # bf16
    biases = (hidden + 2 * hidden + (n_actions + 1)) * 4    # f32
    temps = tb * (3 * hidden + (n_actions + 1)) * 4 * 2     # f32 h/z/slab + bf16 copies
    est = 2 * (x_tile + out_tile + weights + biases) + temps
    # headroom, but stay well below v7x's 64 MiB physical VMEM
    return int(min(48 * 1024 * 1024, max(16 * 1024 * 1024, 4 * est)))


def _dueling_kernel(x_ref, w1_ref, b1_ref, wbr1_ref, bbr1_ref, wbr2_ref, bbr2_ref,
                    out_ref):
    # hidden = relu(x @ W1 + b1)      (bf16 operands, f32 accumulation, f32 epilogue)
    h = jnp.dot(x_ref[...], w1_ref[...], preferred_element_type=jnp.float32)
    h = jnp.maximum(h + b1_ref[...], 0.0)

    # fused branch layer 1: [adv_h | val_h] = relu(h @ [Wa1 | Wv1] + [ba1 | bv1])
    z = jnp.dot(h.astype(jnp.bfloat16), wbr1_ref[...],
                preferred_element_type=jnp.float32)
    z = jnp.maximum(z + bbr1_ref[...], 0.0)

    # fused branch layer 2: [advantage | value] = z @ blockdiag(Wa2, Wv2) + [ba2 | bv2]
    out_ref[...] = jnp.dot(z.astype(jnp.bfloat16), wbr2_ref[...],
                           preferred_element_type=jnp.float32) + bbr2_ref[...]


def dueling_forward(x, params, *, max_batch_tile=1024):
    (w1, b1, wa1, ba1, wa2, ba2, wv1, bv1, wv2, bv2) = params
    B, n_states = x.shape
    H = w1.shape[1]
    A = wa2.shape[1]

    # ---- trace-time weight fusion (once per trace, tiny) ----
    w_br1 = jnp.concatenate([wa1, wv1], axis=1)                    # (H, 2H)
    b_br1 = jnp.concatenate([ba1, bv1], axis=1)                    # (1, 2H)
    w_br2 = jnp.zeros((2 * H, A + 1), jnp.float32)
    w_br2 = w_br2.at[:H, :A].set(wa2).at[H:, A:].set(wv2)          # block-diag (2H, A+1)
    b_br2 = jnp.concatenate([ba2, bv2], axis=1)                    # (1, A+1)

    # bf16 operands feed the MXU (halves DMA bytes); biases/accumulation stay f32.
    w1_b = w1.astype(jnp.bfloat16)
    w_br1_b = w_br1.astype(jnp.bfloat16)
    w_br2_b = w_br2.astype(jnp.bfloat16)

    TB, B_pad = _batch_tiling(B, max_batch_tile)
    n_tiles = B_pad // TB

    x_b = x.astype(jnp.bfloat16)
    if B_pad != B:
        x_b = jnp.pad(x_b, ((0, B_pad - B), (0, 0)))

    def _resident(shape):
        # full-array block, constant index_map -> stays in VMEM across grid steps
        return pl.BlockSpec(shape, lambda i: (0, 0))

    in_specs = [
        pl.BlockSpec((TB, n_states), lambda i: (i, 0)),  # x: streamed over the batch
        _resident(w1_b.shape), _resident(b1.shape),
        _resident(w_br1_b.shape), _resident(b_br1.shape),
        _resident(w_br2_b.shape), _resident(b_br2.shape),
    ]
    # output: streamed (TB, A+1) slab per tile -> writeback overlaps compute,
    # VMEM does not scale with B, batch axis can be megacore-parallel.
    out_spec = pl.BlockSpec((TB, A + 1), lambda i: (i, 0))

    slab = pl.pallas_call(
        _dueling_kernel,
        out_shape=jax.ShapeDtypeStruct((B_pad, A + 1), jnp.float32),
        grid=(n_tiles,),
        in_specs=in_specs,
        out_specs=out_spec,
        compiler_params=pltpu.CompilerParams(
            dimension_semantics=("parallel",),   # no carried state across batch tiles
            vmem_limit_bytes=_vmem_budget_bytes(TB, n_states, H, A),
        ),
    )(x_b, w1_b, b1, w_br1_b, b_br1, w_br2_b, b_br2)

    # Fused XLA epilogue: drop padded rows, global advantage mean, dueling combine.
    slab = slab[:B]
    adv = slab[:, :A]
    val = slab[:, A:A + 1]
    return val + adv - jnp.mean(adv)


def init_params(key, n_states, n_actions, hidden_dim):
    """Deterministic synthetic init (uniform, PyTorch-ish fan-in scaling)."""
    def linear(key, fan_in, fan_out):
        k1, k2 = jax.random.split(key)
        bound = 1.0 / jnp.sqrt(fan_in)
        w = jax.random.uniform(k1, (fan_in, fan_out), jnp.float32, -bound, bound)
        b = jax.random.uniform(k2, (1, fan_out), jnp.float32, -bound, bound)
        return w, b

    keys = jax.random.split(key, 5)
    w1, b1 = linear(keys[0], n_states, hidden_dim)
    wa1, ba1 = linear(keys[1], hidden_dim, hidden_dim)
    wa2, ba2 = linear(keys[2], hidden_dim, n_actions)
    wv1, bv1 = linear(keys[3], hidden_dim, hidden_dim)
    wv2, bv2 = linear(keys[4], hidden_dim, 1)
    return (w1, b1, wa1, ba1, wa2, ba2, wv1, bv1, wv2, bv2)


def reference_forward_f32(x, params):
    """Pure f32 JAX equivalent of the PyTorch forward (global advantage mean)."""
    (w1, b1, wa1, ba1, wa2, ba2, wv1, bv1, wv2, bv2) = params
    h = jnp.maximum(x @ w1 + b1, 0.0)
    a = jnp.maximum(h @ wa1 + ba1, 0.0)
    adv = a @ wa2 + ba2
    v = jnp.maximum(h @ wv1 + bv1, 0.0)
    val = v @ wv2 + bv2
    return val + adv - jnp.mean(adv)


def reference_forward_bf16(x, params):
    """Same numerics as the kernel: bf16 dot operands, f32 accumulation/epilogue."""
    (w1, b1, wa1, ba1, wa2, ba2, wv1, bv1, wv2, bv2) = params
    dot = lambda a, b: jnp.dot(a.astype(jnp.bfloat16), b.astype(jnp.bfloat16),
                               preferred_element_type=jnp.float32)
    h = jnp.maximum(dot(x, w1) + b1, 0.0)
    a = jnp.maximum(dot(h, wa1) + ba1, 0.0)
    adv = dot(a, wa2) + ba2
    v = jnp.maximum(dot(h, wv1) + bv1, 0.0)
    val = dot(v, wv2) + bv2
    return val + adv - jnp.mean(adv)


if __name__ == "__main__":
    B, n_states, n_actions, hidden_dim = 2, 16, 4, 32

    key = jax.random.PRNGKey(0)
    kx, kp = jax.random.split(key)
    x = jax.random.normal(kx, (B, n_states), jnp.float32)
    params = init_params(kp, n_states, n_actions, hidden_dim)

    fwd = jax.jit(lambda x, p: dueling_forward(x, p))
    out = fwd(x, params)
    jax.block_until_ready(out)

    ref_bf = reference_forward_bf16(x, params)   # matches kernel numerics
    ref_32 = reference_forward_f32(x, params)    # PyTorch-equivalent f32 math

    assert out.shape == (B, n_actions)
    assert jnp.allclose(out, ref_bf, atol=1e-3, rtol=1e-3), \
        f"mismatch vs bf16-matched reference: {jnp.max(jnp.abs(out - ref_bf))}"
    assert jnp.allclose(out, ref_32, atol=5e-2, rtol=5e-2), \
        f"mismatch vs f32 reference: {jnp.max(jnp.abs(out - ref_32))}"

    print("KERNEL_OK")
</pallas_src>

<mosaic_0001>
module attributes {stable_mosaic.version = 11 : i64} {
  func.func @_dueling_kernel(%arg0: i32, %arg1: memref<16x16xbf16, #tpu.memory_space<vmem>>, %arg2: memref<16x32xbf16, #tpu.memory_space<vmem>>, %arg3: memref<1x32xf32, #tpu.memory_space<vmem>>, %arg4: memref<32x64xbf16, #tpu.memory_space<vmem>>, %arg5: memref<1x64xf32, #tpu.memory_space<vmem>>, %arg6: memref<64x5xbf16, #tpu.memory_space<vmem>>, %arg7: memref<1x5xf32, #tpu.memory_space<vmem>>, %arg8: memref<16x5xf32, #tpu.memory_space<vmem>>) attributes {dimension_semantics = [#tpu.dimension_semantics<parallel>], iteration_bounds = array<i64: 1>, scalar_prefetch = 0 : i64, scratch_operands = 0 : i64, tpu.core_type = #tpu.core_type<tc>, window_params = [{transform_indices = @transform_0, window_bounds = array<i64: 16, 16>}, {pipeline_mode = #tpu.pipeline_mode<synchronous>, transform_indices = @transform_1, window_bounds = array<i64: 16, 32>}, {pipeline_mode = #tpu.pipeline_mode<synchronous>, transform_indices = @transform_2, window_bounds = array<i64: 1, 32>}, {pipeline_mode = #tpu.pipeline_mode<synchronous>, transform_indices = @transform_3, window_bounds = array<i64: 32, 64>}, {pipeline_mode = #tpu.pipeline_mode<synchronous>, transform_indices = @transform_4, window_bounds = array<i64: 1, 64>}, {pipeline_mode = #tpu.pipeline_mode<synchronous>, transform_indices = @transform_5, window_bounds = array<i64: 64, 5>}, {pipeline_mode = #tpu.pipeline_mode<synchronous>, transform_indices = @transform_6, window_bounds = array<i64: 1, 5>}, {transform_indices = @transform_7, window_bounds = array<i64: 16, 5>}]} {
    %c0 = arith.constant 0 : index
    %c0_0 = arith.constant 0 : index
    %0 = vector.load %arg1[%c0, %c0_0] : memref<16x16xbf16, #tpu.memory_space<vmem>>, vector<16x16xbf16>
    %c0_1 = arith.constant 0 : index
    %c0_2 = arith.constant 0 : index
    %1 = vector.load %arg2[%c0_1, %c0_2] : memref<16x32xbf16, #tpu.memory_space<vmem>>, vector<16x32xbf16>
    %cst = arith.constant dense<0.000000e+00> : vector<16x32xf32>
    %2 = tpu.matmul %0, %1, %cst {dimension_numbers = #tpu.dot_dimension_numbers<[1], [0], [0], [1], [0, 0, 1, 1], [], []>} : vector<16x16xbf16>, vector<16x32xbf16>, vector<16x32xf32> -> vector<16x32xf32>
    %c0_3 = arith.constant 0 : index
    %c0_4 = arith.constant 0 : index
    %3 = vector.load %arg3[%c0_3, %c0_4] : memref<1x32xf32, #tpu.memory_space<vmem>>, vector<1x32xf32>
    %4 = vector.broadcast %3 : vector<1x32xf32> to vector<16x32xf32>
    %5 = arith.addf %2, %4 : vector<16x32xf32>
    %cst_5 = arith.constant 0.000000e+00 : f32
    %6 = vector.broadcast %cst_5 : f32 to vector<16x32xf32>
    %7 = arith.maximumf %5, %6 : vector<16x32xf32>
    %8 = arith.truncf %7 : vector<16x32xf32> to vector<16x32xbf16>
    %c0_6 = arith.constant 0 : index
    %c0_7 = arith.constant 0 : index
    %9 = vector.load %arg4[%c0_6, %c0_7] : memref<32x64xbf16, #tpu.memory_space<vmem>>, vector<32x64xbf16>
    %cst_8 = arith.constant dense<0.000000e+00> : vector<16x64xf32>
    %10 = tpu.matmul %8, %9, %cst_8 {dimension_numbers = #tpu.dot_dimension_numbers<[1], [0], [0], [1], [0, 0, 1, 1], [], []>} : vector<16x32xbf16>, vector<32x64xbf16>, vector<16x64xf32> -> vector<16x64xf32>
    %c0_9 = arith.constant 0 : index
    %c0_10 = arith.constant 0 : index
    %11 = vector.load %arg5[%c0_9, %c0_10] : memref<1x64xf32, #tpu.memory_space<vmem>>, vector<1x64xf32>
    %12 = vector.broadcast %11 : vector<1x64xf32> to vector<16x64xf32>
    %13 = arith.addf %10, %12 : vector<16x64xf32>
    %cst_11 = arith.constant 0.000000e+00 : f32
    %14 = vector.broadcast %cst_11 : f32 to vector<16x64xf32>
    %15 = arith.maximumf %13, %14 : vector<16x64xf32>
    %16 = arith.truncf %15 : vector<16x64xf32> to vector<16x64xbf16>
    %c0_12 = arith.constant 0 : index
    %c0_13 = arith.constant 0 : index
    %17 = vector.load %arg6[%c0_12, %c0_13] : memref<64x5xbf16, #tpu.memory_space<vmem>>, vector<64x5xbf16>
    %cst_14 = arith.constant dense<0.000000e+00> : vector<16x5xf32>
    %18 = tpu.matmul %16, %17, %cst_14 {dimension_numbers = #tpu.dot_dimension_numbers<[1], [0], [0], [1], [0, 0, 1, 1], [], []>} : vector<16x64xbf16>, vector<64x5xbf16>, vector<16x5xf32> -> vector<16x5xf32>
    %c0_15 = arith.constant 0 : index
    %c0_16 = arith.constant 0 : index
    %19 = vector.load %arg7[%c0_15, %c0_16] : memref<1x5xf32, #tpu.memory_space<vmem>>, vector<1x5xf32>
    %20 = vector.broadcast %19 : vector<1x5xf32> to vector<16x5xf32>
    %21 = arith.addf %18, %20 : vector<16x5xf32>
    %c0_17 = arith.constant 0 : index
    %c0_18 = arith.constant 0 : index
    %22 = vector.load %arg8[%c0_17, %c0_18] : memref<16x5xf32, #tpu.memory_space<vmem>>, vector<16x5xf32>
    tpu.vector_store %arg8[%c0_17, %c0_18], %21 {strides = array<i32>} : memref<16x5xf32, #tpu.memory_space<vmem>>, vector<16x5xf32>,
    return
  }
  func.func @transform_0(%arg0: i32) -> (i32, i32) {
    %c0_i32 = arith.constant 0 : i32
    %c0_i32_0 = arith.constant 0 : i32
    return %arg0, %c0_i32 : i32, i32
  }
  func.func @transform_1(%arg0: i32) -> (i32, i32) {
    %c0_i32 = arith.constant 0 : i32
    %c0_i32_0 = arith.constant 0 : i32
    %c0_i32_1 = arith.constant 0 : i32
    return %c0_i32, %c0_i32_0 : i32, i32
  }
  func.func @transform_2(%arg0: i32) -> (i32, i32) {
    %c0_i32 = arith.constant 0 : i32
    %c0_i32_0 = arith.constant 0 : i32
    %c0_i32_1 = arith.constant 0 : i32
    return %c0_i32, %c0_i32_0 : i32, i32
  }
  func.func @transform_3(%arg0: i32) -> (i32, i32) {
    %c0_i32 = arith.constant 0 : i32
    %c0_i32_0 = arith.constant 0 : i32
    %c0_i32_1 = arith.constant 0 : i32
    return %c0_i32, %c0_i32_0 : i32, i32
  }
  func.func @transform_4(%arg0: i32) -> (i32, i32) {
    %c0_i32 = arith.constant 0 : i32
    %c0_i32_0 = arith.constant 0 : i32
    %c0_i32_1 = arith.constant 0 : i32
    return %c0_i32, %c0_i32_0 : i32, i32
  }
  func.func @transform_5(%arg0: i32) -> (i32, i32) {
    %c0_i32 = arith.constant 0 : i32
    %c0_i32_0 = arith.constant 0 : i32
    %c0_i32_1 = arith.constant 0 : i32
    return %c0_i32, %c0_i32_0 : i32, i32
  }
  func.func @transform_6(%arg0: i32) -> (i32, i32) {
    %c0_i32 = arith.constant 0 : i32
    %c0_i32_0 = arith.constant 0 : i32
    %c0_i32_1 = arith.constant 0 : i32
    return %c0_i32, %c0_i32_0 : i32, i32
  }
  func.func @transform_7(%arg0: i32) -> (i32, i32) {
    %c0_i32 = arith.constant 0 : i32
    %c0_i32_0 = arith.constant 0 : i32
    return %arg0, %c0_i32 : i32, i32
  }
}

</mosaic_0001>

<llo_original>
// kernel: _lambda_.1
$region0: #{_lambda_.1}
  #allocation0 [shape = 'u32[]', space=smem, size = 0x4, offset = 0x4, fixed_abs, tag = 'smem constant byte address 0x4 - core index']
  #allocation1 [shape = 'u32[72,128]{1,0:T(1,128)}', space=vmem, size = 0x9000, scoped, tag = 'internal scratch']
  %s0 = inlined_call_operand.vmem [shape: bf16[16,16], index: 0, kind: input, shape index: {}]
  %s1 = inlined_call_operand.vmem [shape: bf16[16,32], index: 1, kind: input, shape index: {}]
  %s2 = inlined_call_operand.vmem [shape: f32[1,32], index: 2, kind: input, shape index: {}]
  %s3 = inlined_call_operand.vmem [shape: bf16[32,64], index: 3, kind: input, shape index: {}]
  %s4 = inlined_call_operand.vmem [shape: f32[1,64], index: 4, kind: input, shape index: {}]
  %s5 = inlined_call_operand.vmem [shape: bf16[64,5], index: 5, kind: input, shape index: {}]
  %s6 = inlined_call_operand.vmem [shape: f32[1,5], index: 6, kind: input, shape index: {}]
  %s7 = inlined_call_operand.vmem [shape: f32[16,5], index: 7, kind: output, shape index: {}]
  %s8 = sld [smem:[#allocation0]]
  $region38: #{_lambda_.1} parent=0
    _
  %s10 = ssub.s32 1, %s8
  %s11 = scalar_select 0, %s10, %s8
  // Predicated region
  $region2: #{_lambda_.1} parent=0 // pred_check
    _
  $region3: #{_lambda_.1} parent=0 // pred_check_branch
    %13 = sbr.rel (0) target = $region5
  $region4: #{_lambda_.1} parent=0 // pred_region
    _
  $region5: #{_lambda_.1} parent=0 // pred_fallthru
    _
  // Predicated region
  $region6: #{_lambda_.1} parent=0 // pred_check
    _
  $region7: #{_lambda_.1} parent=0 // pred_check_branch
    %15 = sbr.rel (0) target = $region9
  $region8: #{_lambda_.1} parent=0 // pred_region
    _
  $region9: #{_lambda_.1} parent=0 // pred_fallthru
    _
  // Predicated region
  $region10: #{_lambda_.1} parent=0 // pred_check
    _
  $region11: #{_lambda_.1} parent=0 // pred_check_branch
    %17 = sbr.rel (0) target = $region13
  $region12: #{_lambda_.1} parent=0 // pred_region
    _
  $region13: #{_lambda_.1} parent=0 // pred_fallthru
    _
  // Predicated region
  $region14: #{_lambda_.1} parent=0 // pred_check
    _
  $region15: #{_lambda_.1} parent=0 // pred_check_branch
    %19 = sbr.rel (0) target = $region17
  $region16: #{_lambda_.1} parent=0 // pred_region
    _
  $region17: #{_lambda_.1} parent=0 // pred_fallthru
    _
  // Predicated region
  $region18: #{_lambda_.1} parent=0 // pred_check
    _
  $region19: #{_lambda_.1} parent=0 // pred_check_branch
    %21 = sbr.rel (0) target = $region21
  $region20: #{_lambda_.1} parent=0 // pred_region
    _
  $region21: #{_lambda_.1} parent=0 // pred_fallthru
    _
  // Predicated region
  $region22: #{_lambda_.1} parent=0 // pred_check
    _
  $region23: #{_lambda_.1} parent=0 // pred_check_branch
    %23 = sbr.rel (0) target = $region25
  $region24: #{_lambda_.1} parent=0 // pred_region
    _
  $region25: #{_lambda_.1} parent=0 // pred_fallthru
    _
  // Predicated region
  $region26: #{_lambda_.1} parent=0 // pred_check
    _
  $region27: #{_lambda_.1} parent=0 // pred_check_branch
    %25 = sbr.rel (0) target = $region29
  $region28: #{_lambda_.1} parent=0 // pred_region
    _
  $region29: #{_lambda_.1} parent=0 // pred_fallthru
    _
  %v27 = vld [vmem:[%s0] sm:$0xf]
  %v28 = vld [vmem:[%s0 + $0x4] sm:$0xf]
  %v29 = vld [vmem:[%s1] sm:$0xf]
  %v30 = vld [vmem:[%s1 + $0x4] sm:$0xf]
  %v31 = vld [vmem:[%s2] sm:$0x1]
  %v33 = vperm.slane %v31, 0
  %v37 = vunpack.c.l.b16 %v27
  %v38 = vunpack.c.l.b16 %v28
  %v39 = vpack.c.b16 %v38, %v37
  %v42 = vunpack.c.l.b16 %v29
  %v43 = vunpack.c.l.b16 %v30
  %v44 = vpack.c.b16 %v43, %v42
  %vm46 = vcmask 130048
  %v48 = vsel %vm46, %v39, 0
  %50 = vmatpush.bf16.msra.mxu0 0
  %51 = vmatpush.bf16.msra.mxu0 0
  %52 = vmatpush.bf16.msra.mxu0 0
  %53 = vmatpush.bf16.msra.mxu0 0
  %54 = vmatpush.bf16.msra.mxu0 0
  %55 = vmatpush.bf16.msra.mxu0 0
  %56 = vmatpush.bf16.msra.mxu0 0
  %57 = vmatpush.bf16.msra.mxu0 %v44
  %58 = vmatmul.bf16.gmra.mxu0 %v48
  %v59 = vpop.f32.mrf.mxu0
  %v60 = vadd.f32 %v33, %v59
  %v61 = vpop.f32.mrf.mxu0
  %v62 = vadd.f32 %v33, %v61
  %63 = vdwg.mxu0
  %v64 = vmax.f32 %v60, 0.0
  %v65 = vmax.f32 %v62, 0.0
  %v66 = vpack.c.bf16 %v65, %v64
  %v67 = vld [vmem:[%s3] sm:$0xf]
  %v68 = vld [vmem:[%s3 + $0x4] sm:$0xf]
  %v69 = vld [vmem:[%s3 + $0x8] sm:$0xf]
  %v70 = vld [vmem:[%s3 + $0xc] sm:$0xf]
  %v71 = vld [vmem:[%s4] sm:$0x1]
  %v73 = vperm.slane %v71, 0
  %v79 = vunpack.c.l.b16 %v67
  %v80 = vunpack.c.l.b16 %v68
  %v81 = vunpack.c.l.b16 %v69
  %v82 = vunpack.c.l.b16 %v70
  %v83 = vpack.c.b16 %v80, %v79
  %v84 = vpack.c.b16 %v82, %v81
  %vm87 = vcmask 261120
  %v89 = vsel %vm87, %v66, 0
  %91 = vmatpush.bf16.msra.mxu0 0
  %92 = vmatpush.bf16.msra.mxu0 0
  %93 = vmatpush.bf16.msra.mxu0 0
  %94 = vmatpush.bf16.msra.mxu0 0
  %95 = vmatpush.bf16.msra.mxu0 0
  %96 = vmatpush.bf16.msra.mxu0 0
  %97 = vmatpush.bf16.msra.mxu0 %v84
  %98 = vmatpush.bf16.msra.mxu0 %v83
  %99 = vmatmul.bf16.gmra.mxu0 %v89
  %v100 = vpop.f32.mrf.mxu0
  %v101 = vadd.f32 %v73, %v100
  %v102 = vpop.f32.mrf.mxu0
  %v103 = vadd.f32 %v73, %v102
  %104 = vdwg.mxu0
  %v105 = vmax.f32 %v101, 0.0
  %v106 = vmax.f32 %v103, 0.0
  %v107 = vpack.c.bf16 %v106, %v105
  %v108 = vld [vmem:[%s5] sm:$0xf]
  %v109 = vld [vmem:[%s5 + $0x4] sm:$0xf]
  %v110 = vld [vmem:[%s5 + $0x8] sm:$0xf]
  %v111 = vld [vmem:[%s5 + $0xc] sm:$0xf]
  %v112 = vld [vmem:[%s5 + $0x10] sm:$0xf]
  %v113 = vld [vmem:[%s5 + $0x14] sm:$0xf]
  %v114 = vld [vmem:[%s5 + $0x18] sm:$0xf]
  %v115 = vld [vmem:[%s5 + $0x1c] sm:$0xf]
  %v116 = vld [vmem:[%s6] sm:$0x1]
  %v118 = vperm.slane %v116, 0
  %v128 = vunpack.c.l.b16 %v108
  %v129 = vunpack.c.l.b16 %v109
  %v130 = vunpack.c.l.b16 %v110
  %v131 = vunpack.c.l.b16 %v111
  %v132 = vunpack.c.l.b16 %v112
  %v133 = vunpack.c.l.b16 %v113
  %v134 = vunpack.c.l.b16 %v114
  %v135 = vunpack.c.l.b16 %v115
  %v136 = vpack.c.b16 %v129, %v128
  %v137 = vpack.c.b16 %v131, %v130
  %v138 = vpack.c.b16 %v133, %v132
  %v139 = vpack.c.b16 %v135, %v134
  %vm144 = vcmask 523264
  %v146 = vsel %vm144, %v107, 0
  %148 = vmatpush.bf16.msra.mxu0 0
  %149 = vmatpush.bf16.msra.mxu0 0
  %150 = vmatpush.bf16.msra.mxu0 0
  %151 = vmatpush.bf16.msra.mxu0 0
  %152 = vmatpush.bf16.msra.mxu0 %v139
  %153 = vmatpush.bf16.msra.mxu0 %v138
  %154 = vmatpush.bf16.msra.mxu0 %v137
  %155 = vmatpush.bf16.msra.mxu0 %v136
  %156 = vmatmul.bf16.gmra.mxu0 %v146
  %v157 = vpop.f32.mrf.mxu0
  %v158 = vadd.f32 %v118, %v157
  %v159 = vpop.f32.mrf.mxu0
  %v160 = vadd.f32 %v118, %v159
  %161 = vdwg.mxu0
  %vm162 = vcmask 39936
  %163 = vst.msk [vmem:[%s7] sm:$0xff] %vm162, %v158
  %164 = vst.msk [vmem:[%s7 + $0x8] sm:$0xff] %vm162, %v160
  // Predicated region
  $region30: #{_lambda_.1} parent=0 // pred_check
    _
  $region31: #{_lambda_.1} parent=0 // pred_check_branch
    %166 = sbr.rel (0) target = $region33
  $region32: #{_lambda_.1} parent=0 // pred_region
    _
  $region33: #{_lambda_.1} parent=0 // pred_fallthru
    _
  // Predicated region
  $region34: #{_lambda_.1} parent=0 // pred_check
    _
  $region35: #{_lambda_.1} parent=0 // pred_check_branch
    %168 = sbr.rel (0) target = $region37
  $region36: #{_lambda_.1} parent=0 // pred_region
    _
  $region37: #{_lambda_.1} parent=0 // pred_fallthru
    _

</llo_original>
